<compile_context>
chip_gen: v7x
topology: tpu7x:2x2x1
jax: 0.10.0
libtpu: 0.0.40
codegen_flags: <defaults>
</compile_context>

<pallas_src>
import functools

import jax
import jax.numpy as jnp
from jax.experimental import pallas as pl
from jax.experimental.pallas import tpu as pltpu


def affine_kernel(wb_ref, x_ref, o_ref):
    """y = x0*w0 + x1*w1 + b, purely on the VPU (no MXU for a K=2 contraction).

    wb_ref: (3,) f32 in SMEM            -> [w0, w1, b]
    x_ref : (2, tile_r, L) f32 in VMEM  -> feature-major, batch dense on sublanes+lanes
    o_ref : (tile_r, L)    f32 in VMEM  -> lane-dense output (unmasked vst)
    """
    o_ref[...] = x_ref[0] * wb_ref[0] + x_ref[1] * wb_ref[1] + wb_ref[2]


@functools.partial(jax.jit, static_argnames=("lanes", "max_tile_rows"))
def circle0_forward(x, w1, b1, w2, b2, *, lanes=512, max_tile_rows=512):
    """x: (N, 2) float32 -> (N, 1) float32.

    Weights are stored as (in_features, out_features), i.e. the transpose of
    torch's nn.Linear.weight layout.
    """
    n = x.shape[0]

    # ---- fold the two linear layers into one affine map (exact, no nonlinearity) ----
    w = (w1 @ w2).reshape(2)
    b = (b1 @ w2 + b2).reshape(1)
    wb = jnp.concatenate([w, b]).astype(jnp.float32)          # (3,) -> SMEM

    # ---- dense layout: batch -> (n_rows, lanes) slab, feature on the leading axis ----
    n_rows = -(-n // lanes)
    n_pad = n_rows * lanes
    x_t = x.astype(jnp.float32).T                              # (2, N); fuses under jit
    if n_pad != n:
        x_t = jnp.pad(x_t, ((0, 0), (0, n_pad - n)))           # tail-only pad (< lanes)
    x3 = x_t.reshape(2, n_rows, lanes)

    # ---- row-tile: biggest tile that fits comfortably in scoped VMEM on every
    #      generation (double-buffered in+out ~= 24*tile_r*lanes bytes <= ~6 MiB),
    #      while keeping >= 2 grid steps when possible (v7x megacore). ----
    if n_rows < 16:
        tile_r = n_rows                                        # single block == full dim
    else:
        half = -(-n_rows // 2)
        tile_r = min(max_tile_rows, ((half + 7) // 8) * 8)     # multiple of 8, < n_rows

    grid = (pl.cdiv(n_rows, tile_r),)

    out = pl.pallas_call(
        affine_kernel,
        out_shape=jax.ShapeDtypeStruct((n_rows, lanes), jnp.float32),
        grid=grid,
        in_specs=[
            # folded scalar params, resident in SMEM for the whole kernel
            pl.BlockSpec(memory_space=pltpu.MemorySpace.SMEM),
            # activations: (2, tile_r, lanes) dense block per grid step
            pl.BlockSpec((2, tile_r, lanes), lambda i: (0, i, 0)),
        ],
        out_specs=pl.BlockSpec((tile_r, lanes), lambda i: (i, 0)),
        compiler_params=pltpu.CompilerParams(
            dimension_semantics=("parallel",),
        ),
    )(wb, x3)

    # (n_rows, lanes) -> (N, 1); flatten + slice fuse with the kernel output under jit.
    return out.reshape(n_pad, 1)[:n]


def init_params(key):
    """Deterministic init mimicking torch.nn.Linear (uniform +/- 1/sqrt(fan_in))."""
    k1, k2, k3, k4 = jax.random.split(key, 4)
    bound1 = 1.0 / jnp.sqrt(2.0)
    bound2 = 1.0 / jnp.sqrt(5.0)
    # stored as (in_features, out_features) — transpose of torch's (out, in)
    w1 = jax.random.uniform(k1, (2, 5), jnp.float32, -bound1, bound1)
    b1 = jax.random.uniform(k2, (1, 5), jnp.float32, -bound1, bound1)
    w2 = jax.random.uniform(k3, (5, 1), jnp.float32, -bound2, bound2)
    b2 = jax.random.uniform(k4, (1, 1), jnp.float32, -bound2, bound2)
    return w1, b1, w2, b2


if __name__ == "__main__":
    key = jax.random.PRNGKey(0)
    kx, kp = jax.random.split(key)

    w1, b1, w2, b2 = init_params(kp)

    # two small cases: one single-block (with tail padding), one multi-step grid
    # with a partial last block (exercises the v7x two-grid-step path).
    for n in (2000, 9000):
        x = jax.random.normal(jax.random.fold_in(kx, n), (n, 2), jnp.float32)
        out = jax.block_until_ready(circle0_forward(x, w1, b1, w2, b2))

        # pure-JAX reference of the original two-layer forward
        ref = (x @ w1 + b1) @ w2 + b2
        assert out.shape == (n, 1)
        assert jnp.allclose(out, ref, atol=1e-5, rtol=1e-5)

    print("KERNEL_OK")
</pallas_src>

<mosaic_0001>
module attributes {stable_mosaic.version = 11 : i64} {
  func.func @affine_kernel(%arg0: i32, %arg1: memref<3xf32, #tpu.memory_space<smem>>, %arg2: memref<2x4x512xf32, #tpu.memory_space<vmem>>, %arg3: memref<4x512xf32, #tpu.memory_space<vmem>>) attributes {dimension_semantics = [#tpu.dimension_semantics<parallel>], iteration_bounds = array<i64: 1>, scalar_prefetch = 0 : i64, scratch_operands = 0 : i64, tpu.core_type = #tpu.core_type<tc>, window_params = [{transform_indices = @transform_0, window_bounds = array<i64: 3>}, {transform_indices = @transform_1, window_bounds = array<i64: 2, 4, 512>}, {transform_indices = @transform_2, window_bounds = array<i64: 4, 512>}]} {
    %c0 = arith.constant 0 : index
    %c0_0 = arith.constant 0 : index
    %c0_1 = arith.constant 0 : index
    %0 = vector.load %arg2[%c0, %c0_0, %c0_1] : memref<2x4x512xf32, #tpu.memory_space<vmem>>, vector<1x4x512xf32>
    %1 = vector.shape_cast %0 : vector<1x4x512xf32> to vector<4x512xf32>
    %c0_2 = arith.constant 0 : index
    %2 = memref.load %arg1[%c0_2] : memref<3xf32, #tpu.memory_space<smem>>
    %3 = vector.broadcast %2 : f32 to vector<4x512xf32>
    %4 = arith.mulf %1, %3 : vector<4x512xf32>
    %c1 = arith.constant 1 : index
    %c0_3 = arith.constant 0 : index
    %c0_4 = arith.constant 0 : index
    %5 = vector.load %arg2[%c1, %c0_3, %c0_4] : memref<2x4x512xf32, #tpu.memory_space<vmem>>, vector<1x4x512xf32>
    %6 = vector.shape_cast %5 : vector<1x4x512xf32> to vector<4x512xf32>
    %c1_5 = arith.constant 1 : index
    %7 = memref.load %arg1[%c1_5] : memref<3xf32, #tpu.memory_space<smem>>
    %8 = vector.broadcast %7 : f32 to vector<4x512xf32>
    %9 = arith.mulf %6, %8 : vector<4x512xf32>
    %10 = arith.addf %4, %9 : vector<4x512xf32>
    %c2 = arith.constant 2 : index
    %11 = memref.load %arg1[%c2] : memref<3xf32, #tpu.memory_space<smem>>
    %12 = vector.broadcast %11 : f32 to vector<4x512xf32>
    %13 = arith.addf %10, %12 : vector<4x512xf32>
    %c0_6 = arith.constant 0 : index
    %c0_7 = arith.constant 0 : index
    %14 = vector.load %arg3[%c0_6, %c0_7] : memref<4x512xf32, #tpu.memory_space<vmem>>, vector<4x512xf32>
    tpu.vector_store %arg3[%c0_6, %c0_7], %13 {strides = array<i32>} : memref<4x512xf32, #tpu.memory_space<vmem>>, vector<4x512xf32>,
    return
  }
  func.func @transform_0(%arg0: i32) -> i32 {
    %c0_i32 = arith.constant 0 : i32
    %c0_i32_0 = arith.constant 0 : i32
    return %c0_i32 : i32
  }
  func.func @transform_1(%arg0: i32) -> (i32, i32, i32) {
    %c0_i32 = arith.constant 0 : i32
    %c0_i32_0 = arith.constant 0 : i32
    %c0_i32_1 = arith.constant 0 : i32
    return %c0_i32, %arg0, %c0_i32_0 : i32, i32, i32
  }
  func.func @transform_2(%arg0: i32) -> (i32, i32) {
    %c0_i32 = arith.constant 0 : i32
    %c0_i32_0 = arith.constant 0 : i32
    return %arg0, %c0_i32 : i32, i32
  }
}

</mosaic_0001>

<llo_original>
// kernel: circle0_forward.1
$region0: #{circle0_forward.1}
  #allocation0 [shape = 'u32[]', space=smem, size = 0x4, offset = 0x4, fixed_abs, tag = 'smem constant byte address 0x4 - core index']
  #allocation1 [shape = 'u32[144,128]{1,0:T(1,128)}', space=vmem, size = 0x12000, scoped, tag = 'internal scratch']
  %s0 = inlined_call_operand.vmem [shape: f32[3], index: 0, kind: input, shape index: {}]
  %s1 = inlined_call_operand.vmem [shape: f32[2,4,512], index: 1, kind: input, shape index: {}]
  %s2 = inlined_call_operand.vmem [shape: f32[4,512], index: 2, kind: output, shape index: {}]
  %s3 = sld [smem:[#allocation0]]
  $region22: #{circle0_forward.1} parent=0
    _
  %s5 = ssub.s32 1, %s3
  %s6 = scalar_select 0, %s5, %s3
  $region1: #{circle0_forward.1} parent=0
    #allocation2 [shape = 'u8[512]{0}', space=smem, size = 0x200, scoped, tag = 'input window, operand 0, single buffered']
    #allocation3 [shape = 's32[1]{0}', space=sflag, size = 0x4, scoped, tag = 'scoped memory for circle0_forward.1']
    %7 = vsyncpa [#allocation3], 0
    // Predicated region
    $region2: #{circle0_forward.1} parent=1 // pred_check
      _
    $region3: #{circle0_forward.1} parent=1 // pred_check_branch
      %9 = sbr.rel (0) target = $region5
    $region4: #{circle0_forward.1} parent=1 // pred_region
      %s11 = ssub.s32 16, 16
      %12 = vsyncadd [#allocation3], %s11
      %s14 = sshll.u32 %s0, 4
      %s15 = int_to_ptr.vmem [resolvable:$true] %s14
      %17 = dma.vmem_to_smem %s15, 16, [#allocation2], [#allocation3]
    $region5: #{circle0_forward.1} parent=1 // pred_fallthru
      _
    // Predicated region
    $region6: #{circle0_forward.1} parent=1 // pred_check
      _
    $region7: #{circle0_forward.1} parent=1 // pred_check_branch
      %19 = sbr.rel (0) target = $region9
    $region8: #{circle0_forward.1} parent=1 // pred_region
      _
    $region9: #{circle0_forward.1} parent=1 // pred_fallthru
      _
    // Predicated region
    $region10: #{circle0_forward.1} parent=1 // pred_check
      _
    $region11: #{circle0_forward.1} parent=1 // pred_check_branch
      %21 = sbr.rel (0) target = $region13
    $region12: #{circle0_forward.1} parent=1 // pred_region
      %22 = dma.done [#allocation3], 16
    $region13: #{circle0_forward.1} parent=1 // pred_fallthru
      _
    %23 = sfence
    %v24 = vld [vmem:[%s1] sm:$0xff]
    %v25 = vld [vmem:[%s1 + $0x8] sm:$0xff]
    %s26 = sld [smem:[#allocation2]]
    %v27 = vstv %s26
    %v28 = vmul.f32 %v24, %v27
    %v29 = vmul.f32 %v25, %v27
    %s30 = scalar_lea.vmem %s1, 16
    %v31 = vld [vmem:[%s30] sm:$0xff]
    %v32 = vld [vmem:[%s30 + $0x8] sm:$0xff]
    %s33 = sld [smem:[#allocation2 + $0x1]]
    %v34 = vstv %s33
    %v35 = vmul.f32 %v31, %v34
    %v36 = vmul.f32 %v32, %v34
    %v37 = vadd.f32 %v28, %v35
    %v38 = vadd.f32 %v29, %v36
    %s39 = sld [smem:[#allocation2 + $0x2]]
    %v40 = vstv %s39
    %v41 = vadd.f32 %v37, %v40
    %v42 = vadd.f32 %v38, %v40
    %43 = vst [vmem:[%s2] sm:$0xff] %v41
    %44 = vst [vmem:[%s2 + $0x8] sm:$0xff] %v42
    // Predicated region
    $region14: #{circle0_forward.1} parent=1 // pred_check
      _
    $region15: #{circle0_forward.1} parent=1 // pred_check_branch
      %46 = sbr.rel (0) target = $region17
    $region16: #{circle0_forward.1} parent=1 // pred_region
      _
    $region17: #{circle0_forward.1} parent=1 // pred_fallthru
      _
    // Predicated region
    $region18: #{circle0_forward.1} parent=1 // pred_check
      _
    $region19: #{circle0_forward.1} parent=1 // pred_check_branch
      %48 = sbr.rel (0) target = $region21
    $region20: #{circle0_forward.1} parent=1 // pred_region
      _
    $region21: #{circle0_forward.1} parent=1 // pred_fallthru
      _
    %49 = vsyncpa [#allocation3], 1

</llo_original>
